<compile_context>
chip_gen: v7x
topology: tpu7x:2x2x1
jax: 0.10.0
libtpu: 0.0.40
codegen_flags: <defaults>
</compile_context>

<pallas_src>
import functools

import jax
import jax.numpy as jnp
from jax.experimental import pallas as pl
from jax.experimental.pallas import tpu as pltpu


def _round_up(x, m):
    return ((x + m - 1) // m) * m


def _clip_classifier_kernel(*refs, true_p, true_h, mask_p, compute_logits):
    if compute_logits:
        (patches_ref, w_patch_ref, b_patch_ref, ln_g_ref, ln_b_ref,
         w_proj_ref, b_proj_ref, w_head_ref, b_head_ref,
         out_ref, acc_ref) = refs
    else:
        (patches_ref, w_patch_ref, b_patch_ref, ln_g_ref, ln_b_ref,
         w_proj_ref, b_proj_ref,
         out_ref, acc_ref) = refs
        w_head_ref = b_head_ref = None

    j = pl.program_id(1)
    last_j = pl.num_programs(1) - 1
    tb, tp, dp = patches_ref.shape
    hp = acc_ref.shape[-1]

    @pl.when(j == 0)
    def _init():
        acc_ref[...] = jnp.zeros_like(acc_ref)

    # ---- clip_base: patch embedding (conv-as-matmul, bf16 in / f32 acc on MXU)
    x = jnp.dot(patches_ref[...].reshape(tb * tp, dp), w_patch_ref[...],
                preferred_element_type=jnp.float32)
    x = x + b_patch_ref[...]                      # f32 bias
    # QuickGELU (CLIP): x * sigmoid(1.702 x) in f32 (VPU/EUP)
    x = x * jax.nn.sigmoid(1.702 * x)
    x = x.reshape(tb, tp, hp)

    # mean pool without a dense pool matrix: accumulate per-image sums.
    if mask_p:
        # Padded patch rows only exist in the LAST patch block -> gate the
        # iota/compare/select there; all earlier (streamed) steps stay clean.
        @pl.when(j == last_j)
        def _acc_masked():
            p_idx = j * tp + jax.lax.broadcasted_iota(jnp.int32, (1, tp, 1), 1)
            acc_ref[...] += jnp.sum(jnp.where(p_idx < true_p, x, 0.0), axis=1)

        @pl.when(j != last_j)
        def _acc_plain():
            acc_ref[...] += jnp.sum(x, axis=1)
    else:
        acc_ref[...] += jnp.sum(x, axis=1)

    @pl.when(j == last_j)
    def _finalize():
        pooled = acc_ref[...] * (1.0 / true_p)            # (tb, hp) f32
        # LayerNorm over the *true* hidden width (padded cols of pooled are 0)
        mu = jnp.sum(pooled, axis=-1, keepdims=True) * (1.0 / true_h)
        centered = pooled - mu
        if hp != true_h:
            col = jax.lax.broadcasted_iota(jnp.int32, (1, hp), 1)
            centered = jnp.where(col < true_h, centered, 0.0)
        var = jnp.sum(centered * centered, axis=-1, keepdims=True) * (1.0 / true_h)
        normed = centered * jax.lax.rsqrt(var + 1e-5)
        normed = normed * ln_g_ref[...] + ln_b_ref[...]
        # CLIP projection -> features
        feats = jnp.dot(normed.astype(w_proj_ref.dtype), w_proj_ref[...],
                        preferred_element_type=jnp.float32) + b_proj_ref[...]
        if compute_logits:
            # ---- classification_head (features never leave VMEM) ----
            logits = jnp.dot(feats.astype(w_head_ref.dtype), w_head_ref[...],
                             preferred_element_type=jnp.float32) + b_head_ref[...]
            out_ref[...] = logits.astype(out_ref.dtype)
        else:
            out_ref[...] = feats.astype(out_ref.dtype)


def _patchify_nchw(images, patch, dtype):
    """NCHW -> (B, num_patches, C*patch*patch), channel-major per patch.

    The cast happens first so XLA's single transpose-copy is written at bf16
    width (half the HBM bytes of an f32 copy); the pad in the caller fuses in.
    """
    B, C, H, W = images.shape
    ph, pw = H // patch, W // patch
    x = images.astype(dtype).reshape(B, C, ph, patch, pw, patch)
    x = jnp.transpose(x, (0, 2, 4, 1, 3, 5))          # (B, ph, pw, C, p, p)
    return x.reshape(B, ph * pw, C * patch * patch)


@functools.partial(jax.jit, static_argnames=("patch", "get_features", "tile_p"))
def clip_classifier_forward(images, params, *, patch=4, get_features=False,
                            tile_p=None):
    B = images.shape[0]
    # One fused bf16 pre-pass (cast + transpose + pad); no Dp padding.
    patches = _patchify_nchw(images, patch, jnp.bfloat16)     # (B, P, Dp) bf16
    _, P, Dp = patches.shape
    H = params["w_patch"].shape[1]
    F = params["w_proj"].shape[1]
    C = params["w_head"].shape[1]

    # Small weight/output lane dims padded to 128 (dense MXU / unmasked vst).
    Hp = _round_up(H, 128)
    Fp = _round_up(F, 128)
    Cp = _round_up(C, 128)

    # Batch tile: as large as possible (amortize per-step overhead, fill the
    # finalize matmul rows) while keeping >= 2 batch blocks whenever the
    # padded batch allows it (v7x megacore needs >= 2 blocks on the
    # "parallel" axis).
    Bp = _round_up(B, 8)
    TB = 8
    for cand in (128, 64, 32, 16):
        if Bp % cand == 0 and Bp // cand >= 2:
            TB = cand
            break

    # Patch tile: multiple of 16 for bf16 sublane packing; default 512.
    if tile_p is None:
        tile_p = min(512, _round_up(P, 16))
    TP = _round_up(tile_p, 16)
    Pp = _round_up(P, TP)

    # bf16 matmul operands (f32 accumulation in-kernel); f32 bias/LN params.
    patches_p = jnp.pad(patches, ((0, Bp - B), (0, Pp - P), (0, 0)))
    w_patch = jnp.pad(params["w_patch"].astype(jnp.bfloat16), ((0, 0), (0, Hp - H)))
    b_patch = jnp.pad(params["b_patch"].astype(jnp.float32), ((0, 0), (0, Hp - H)))
    ln_g = jnp.pad(params["ln_g"].astype(jnp.float32), ((0, 0), (0, Hp - H)))
    ln_b = jnp.pad(params["ln_b"].astype(jnp.float32), ((0, 0), (0, Hp - H)))
    w_proj = jnp.pad(params["w_proj"].astype(jnp.bfloat16),
                     ((0, Hp - H), (0, Fp - F)))
    b_proj = jnp.pad(params["b_proj"].astype(jnp.float32), ((0, 0), (0, Fp - F)))

    compute_logits = not get_features
    kern = functools.partial(_clip_classifier_kernel,
                             true_p=P, true_h=H,
                             mask_p=(Pp != P),
                             compute_logits=compute_logits)

    const = lambda i, j: (0, 0)     # constant index map -> weights stay resident
    inputs = [patches_p, w_patch, b_patch, ln_g, ln_b, w_proj, b_proj]
    in_specs = [
        # full-extent last dim (== Dp) is allowed even when Dp % 128 != 0
        pl.BlockSpec((TB, TP, Dp), lambda i, j: (i, j, 0)),
        pl.BlockSpec((Dp, Hp), const),
        pl.BlockSpec((1, Hp), const),
        pl.BlockSpec((1, Hp), const),
        pl.BlockSpec((1, Hp), const),
        pl.BlockSpec((Hp, Fp), const),
        pl.BlockSpec((1, Fp), const),
    ]
    if compute_logits:
        w_head = jnp.pad(params["w_head"].astype(jnp.bfloat16),
                         ((0, Fp - F), (0, Cp - C)))
        b_head = jnp.pad(params["b_head"].astype(jnp.float32), ((0, 0), (0, Cp - C)))
        inputs += [w_head, b_head]
        in_specs += [pl.BlockSpec((Fp, Cp), const),
                     pl.BlockSpec((1, Cp), const)]
        out_shape = jax.ShapeDtypeStruct((Bp, Cp), jnp.float32)
        out_spec = pl.BlockSpec((TB, Cp), lambda i, j: (i, 0))
    else:
        out_shape = jax.ShapeDtypeStruct((Bp, Fp), jnp.float32)
        out_spec = pl.BlockSpec((TB, Fp), lambda i, j: (i, 0))

    out = pl.pallas_call(
        kern,
        out_shape=out_shape,
        grid_spec=pltpu.PrefetchScalarGridSpec(
            num_scalar_prefetch=0,
            grid=(Bp // TB, Pp // TP),                # (batch blocks, patch blocks)
            in_specs=in_specs,
            out_specs=out_spec,
            scratch_shapes=[pltpu.VMEM((TB, Hp), jnp.float32)],
        ),
        compiler_params=pltpu.CompilerParams(
            dimension_semantics=("parallel", "arbitrary"),
            # 48 MiB: safe under v7x's 64 MiB physical VMEM, above the default
            # scoped limits on v5e/v6e so larger tiles remain admissible.
            vmem_limit_bytes=48 * 1024 * 1024,
        ),
    )(*inputs)

    if get_features:
        return out[:B, :F]
    return out[:B, :C]


def init_params(key, *, in_ch=4, patch=4, hidden=32, feat=32, num_classes=8):
    dp = in_ch * patch * patch
    ks = jax.random.split(key, 6)
    scale = lambda fan_in: 1.0 / jnp.sqrt(jnp.float32(fan_in))
    return {
        "w_patch": jax.random.normal(ks[0], (dp, hidden), jnp.float32) * scale(dp),
        "b_patch": jnp.zeros((1, hidden), jnp.float32),
        "ln_g": jnp.ones((1, hidden), jnp.float32),
        "ln_b": jnp.zeros((1, hidden), jnp.float32),
        "w_proj": jax.random.normal(ks[1], (hidden, feat), jnp.float32) * scale(hidden),
        "b_proj": jax.random.normal(ks[2], (1, feat), jnp.float32) * 0.01,
        "w_head": jax.random.normal(ks[3], (feat, num_classes), jnp.float32) * scale(feat),
        "b_head": jax.random.normal(ks[4], (1, num_classes), jnp.float32) * 0.01,
    }


def _reference_forward(images, params, patch=4):
    """Plain-JAX reference with the same (bf16-matmul, f32-accumulate) math."""
    bf = jnp.bfloat16
    B = images.shape[0]
    patches = _patchify_nchw(images, patch, bf)                   # (B, P, Dp)
    x = jnp.dot(patches.reshape(-1, patches.shape[-1]),
                params["w_patch"].astype(bf),
                preferred_element_type=jnp.float32) + params["b_patch"]
    x = x * jax.nn.sigmoid(1.702 * x)                              # QuickGELU
    x = x.reshape(B, -1, x.shape[-1]).mean(axis=1)
    mu = x.mean(-1, keepdims=True)
    var = ((x - mu) ** 2).mean(-1, keepdims=True)
    x = (x - mu) * jax.lax.rsqrt(var + 1e-5) * params["ln_g"] + params["ln_b"]
    feats = jnp.dot(x.astype(bf), params["w_proj"].astype(bf),
                    preferred_element_type=jnp.float32) + params["b_proj"]
    logits = jnp.dot(feats.astype(bf), params["w_head"].astype(bf),
                     preferred_element_type=jnp.float32) + params["b_head"]
    return feats, logits


if __name__ == "__main__":
    key = jax.random.PRNGKey(0)
    k_img, k_img2, k_par = jax.random.split(key, 3)

    B, C_in, HW = 2, 4, 16
    images = jax.random.normal(k_img, (B, C_in, HW, HW), jnp.float32)   # NCHW
    params = init_params(k_par, in_ch=C_in, patch=4, hidden=32, feat=32,
                         num_classes=8)

    logits = clip_classifier_forward(images, params, patch=4)
    feats = clip_classifier_forward(images, params, patch=4, get_features=True)
    jax.block_until_ready((logits, feats))

    feats_ref, logits_ref = _reference_forward(images, params, patch=4)
    assert logits.shape == (B, 8) and feats.shape == (B, 32)
    assert jnp.allclose(logits, logits_ref, atol=2e-2, rtol=2e-2)
    assert jnp.allclose(feats, feats_ref, atol=2e-2, rtol=2e-2)

    # Larger image (9x9 = 81 patches) with a small patch tile: exercises the
    # multi-step accumulate path (6 patch blocks) and the last-block pad mask.
    images2 = jax.random.normal(k_img2, (B, C_in, 36, 36), jnp.float32)
    logits2 = clip_classifier_forward(images2, params, patch=4, tile_p=16)
    jax.block_until_ready(logits2)
    _, logits2_ref = _reference_forward(images2, params, patch=4)
    assert jnp.allclose(logits2, logits2_ref, atol=2e-2, rtol=2e-2)

    print("KERNEL_OK")
</pallas_src>

<mosaic_0001>
module attributes {stable_mosaic.version = 11 : i64} {
  func.func @_clip_classifier_kernel(%arg0: i32, %arg1: i32, %arg2: memref<8x16x64xbf16, #tpu.memory_space<vmem>>, %arg3: memref<64x128xbf16, #tpu.memory_space<vmem>>, %arg4: memref<1x128xf32, #tpu.memory_space<vmem>>, %arg5: memref<1x128xf32, #tpu.memory_space<vmem>>, %arg6: memref<1x128xf32, #tpu.memory_space<vmem>>, %arg7: memref<128x128xbf16, #tpu.memory_space<vmem>>, %arg8: memref<1x128xf32, #tpu.memory_space<vmem>>, %arg9: memref<128x128xbf16, #tpu.memory_space<vmem>>, %arg10: memref<1x128xf32, #tpu.memory_space<vmem>>, %arg11: memref<8x128xf32, #tpu.memory_space<vmem>>, %arg12: memref<8x128xf32, #tpu.memory_space<vmem>>) attributes {dimension_semantics = [#tpu.dimension_semantics<parallel>, #tpu.dimension_semantics<arbitrary>], iteration_bounds = array<i64: 1, 1>, scalar_prefetch = 0 : i64, scratch_operands = 1 : i64, tpu.core_type = #tpu.core_type<tc>, window_params = [{transform_indices = @transform_0, window_bounds = array<i64: 8, 16, 64>}, {pipeline_mode = #tpu.pipeline_mode<synchronous>, transform_indices = @transform_1, window_bounds = array<i64: 64, 128>}, {pipeline_mode = #tpu.pipeline_mode<synchronous>, transform_indices = @transform_2, window_bounds = array<i64: 1, 128>}, {pipeline_mode = #tpu.pipeline_mode<synchronous>, transform_indices = @transform_3, window_bounds = array<i64: 1, 128>}, {pipeline_mode = #tpu.pipeline_mode<synchronous>, transform_indices = @transform_4, window_bounds = array<i64: 1, 128>}, {pipeline_mode = #tpu.pipeline_mode<synchronous>, transform_indices = @transform_5, window_bounds = array<i64: 128, 128>}, {pipeline_mode = #tpu.pipeline_mode<synchronous>, transform_indices = @transform_6, window_bounds = array<i64: 1, 128>}, {pipeline_mode = #tpu.pipeline_mode<synchronous>, transform_indices = @transform_7, window_bounds = array<i64: 128, 128>}, {pipeline_mode = #tpu.pipeline_mode<synchronous>, transform_indices = @transform_8, window_bounds = array<i64: 1, 128>}, {transform_indices = @transform_9, window_bounds = array<i64: 8, 128>}]} {
    %c0_i32 = arith.constant 0 : i32
    %0 = arith.cmpi eq, %arg1, %c0_i32 : i32
    %1 = arith.extui %0 : i1 to i32
    %c0_i32_0 = arith.constant 0 : i32
    %2 = arith.cmpi ne, %1, %c0_i32_0 : i32
    scf.if %2 {
      %cst_16 = arith.constant 0.000000e+00 : f32
      %26 = vector.broadcast %cst_16 : f32 to vector<8x128xf32>
      %c0_17 = arith.constant 0 : index
      %c0_18 = arith.constant 0 : index
      %27 = vector.load %arg12[%c0_17, %c0_18] : memref<8x128xf32, #tpu.memory_space<vmem>>, vector<8x128xf32>
      tpu.vector_store %arg12[%c0_17, %c0_18], %26 {strides = array<i32>} : memref<8x128xf32, #tpu.memory_space<vmem>>, vector<8x128xf32>,
    } else {
    }
    %c0 = arith.constant 0 : index
    %c0_1 = arith.constant 0 : index
    %c0_2 = arith.constant 0 : index
    %3 = vector.load %arg2[%c0, %c0_1, %c0_2] : memref<8x16x64xbf16, #tpu.memory_space<vmem>>, vector<8x16x64xbf16>
    %4 = vector.shape_cast %3 : vector<8x16x64xbf16> to vector<128x64xbf16>
    %c0_3 = arith.constant 0 : index
    %c0_4 = arith.constant 0 : index
    %5 = vector.load %arg3[%c0_3, %c0_4] : memref<64x128xbf16, #tpu.memory_space<vmem>>, vector<64x128xbf16>
    %cst = arith.constant dense<0.000000e+00> : vector<128x128xf32>
    %6 = tpu.matmul %4, %5, %cst {dimension_numbers = #tpu.dot_dimension_numbers<[1], [0], [0], [1], [0, 0, 1, 1], [], []>} : vector<128x64xbf16>, vector<64x128xbf16>, vector<128x128xf32> -> vector<128x128xf32>
    %c0_5 = arith.constant 0 : index
    %c0_6 = arith.constant 0 : index
    %7 = vector.load %arg4[%c0_5, %c0_6] : memref<1x128xf32, #tpu.memory_space<vmem>>, vector<1x128xf32>
    %8 = vector.broadcast %7 : vector<1x128xf32> to vector<128x128xf32>
    %9 = arith.addf %6, %8 : vector<128x128xf32>
    %cst_7 = arith.constant 1.702000e+00 : f32
    %10 = vector.broadcast %cst_7 : f32 to vector<128x128xf32>
    %11 = arith.mulf %10, %9 : vector<128x128xf32>
    %12 = arith.negf %11 : vector<128x128xf32>
    %13 = math.exp %12 : vector<128x128xf32>
    %cst_8 = arith.constant 1.000000e+00 : f32
    %14 = vector.broadcast %cst_8 : f32 to vector<128x128xf32>
    %15 = arith.addf %14, %13 : vector<128x128xf32>
    %16 = arith.divf %14, %15 : vector<128x128xf32>
    %17 = arith.mulf %9, %16 : vector<128x128xf32>
    %18 = vector.shape_cast %17 : vector<128x128xf32> to vector<8x16x128xf32>
    %c0_9 = arith.constant 0 : index
    %c0_10 = arith.constant 0 : index
    %19 = vector.load %arg12[%c0_9, %c0_10] : memref<8x128xf32, #tpu.memory_space<vmem>>, vector<8x128xf32>
    %cst_11 = arith.constant dense<0.000000e+00> : vector<8x128xf32>
    %20 = vector.multi_reduction <add>, %18, %cst_11 [1] : vector<8x16x128xf32> to vector<8x128xf32>
    %21 = arith.addf %19, %20 : vector<8x128xf32>
    %c0_12 = arith.constant 0 : index
    %c0_13 = arith.constant 0 : index
    %22 = vector.load %arg12[%c0_12, %c0_13] : memref<8x128xf32, #tpu.memory_space<vmem>>, vector<8x128xf32>
    tpu.vector_store %arg12[%c0_12, %c0_13], %21 {strides = array<i32>} : memref<8x128xf32, #tpu.memory_space<vmem>>, vector<8x128xf32>,
    %c0_i32_14 = arith.constant 0 : i32
    %23 = arith.cmpi eq, %arg1, %c0_i32_14 : i32
    %24 = arith.extui %23 : i1 to i32
    %c0_i32_15 = arith.constant 0 : i32
    %25 = arith.cmpi ne, %24, %c0_i32_15 : i32
    scf.if %25 {
      %c0_16 = arith.constant 0 : index
      %c0_17 = arith.constant 0 : index
      %26 = vector.load %arg12[%c0_16, %c0_17] : memref<8x128xf32, #tpu.memory_space<vmem>>, vector<8x128xf32>
      %cst_18 = arith.constant 6.250000e-02 : f32
      %27 = vector.broadcast %cst_18 : f32 to vector<8x128xf32>
      %28 = arith.mulf %26, %27 : vector<8x128xf32>
      %cst_19 = arith.constant dense<0.000000e+00> : vector<8xf32>
      %29 = vector.multi_reduction <add>, %28, %cst_19 [1] : vector<8x128xf32> to vector<8xf32>
      %30 = vector.shape_cast %29 : vector<8xf32> to vector<8x1xf32>
      %cst_20 = arith.constant 3.125000e-02 : f32
      %31 = vector.broadcast %cst_20 : f32 to vector<8x1xf32>
      %32 = arith.mulf %30, %31 : vector<8x1xf32>
      %33 = vector.broadcast %32 : vector<8x1xf32> to vector<8x128xf32>
      %34 = arith.subf %28, %33 : vector<8x128xf32>
      %35 = tpu.iota {dimensions = array<i32: 1>} : vector<1x128xi32>
      %c32_i32 = arith.constant 32 : i32
      %36 = vector.broadcast %c32_i32 : i32 to vector<1x128xi32>
      %37 = arith.cmpi slt, %35, %36 : vector<1x128xi32>
      %cst_21 = arith.constant 0.000000e+00 : f32
      %38 = vector.shape_cast %37 : vector<1x128xi1> to vector<1x128xi1>
      %39 = vector.broadcast %38 : vector<1x128xi1> to vector<8x128xi1>
      %40 = vector.broadcast %cst_21 : f32 to vector<8x128xf32>
      %41 = arith.select %39, %34, %40 : vector<8x128xi1>, vector<8x128xf32>
      %42 = arith.mulf %41, %41 : vector<8x128xf32>
      %cst_22 = arith.constant dense<0.000000e+00> : vector<8xf32>
      %43 = vector.multi_reduction <add>, %42, %cst_22 [1] : vector<8x128xf32> to vector<8xf32>
      %44 = vector.shape_cast %43 : vector<8xf32> to vector<8x1xf32>
      %cst_23 = arith.constant 3.125000e-02 : f32
      %45 = vector.broadcast %cst_23 : f32 to vector<8x1xf32>
      %46 = arith.mulf %44, %45 : vector<8x1xf32>
      %cst_24 = arith.constant 9.99999974E-6 : f32
      %47 = vector.broadcast %cst_24 : f32 to vector<8x1xf32>
      %48 = arith.addf %46, %47 : vector<8x1xf32>
      %49 = math.rsqrt %48 : vector<8x1xf32>
      %50 = vector.broadcast %49 : vector<8x1xf32> to vector<8x128xf32>
      %51 = arith.mulf %41, %50 : vector<8x128xf32>
      %c0_25 = arith.constant 0 : index
      %c0_26 = arith.constant 0 : index
      %52 = vector.load %arg5[%c0_25, %c0_26] : memref<1x128xf32, #tpu.memory_space<vmem>>, vector<1x128xf32>
      %53 = vector.broadcast %52 : vector<1x128xf32> to vector<8x128xf32>
      %54 = arith.mulf %51, %53 : vector<8x128xf32>
      %c0_27 = arith.constant 0 : index
      %c0_28 = arith.constant 0 : index
      %55 = vector.load %arg6[%c0_27, %c0_28] : memref<1x128xf32, #tpu.memory_space<vmem>>, vector<1x128xf32>
      %56 = vector.broadcast %55 : vector<1x128xf32> to vector<8x128xf32>
      %57 = arith.addf %54, %56 : vector<8x128xf32>
      %58 = arith.truncf %57 : vector<8x128xf32> to vector<8x128xbf16>
      %c0_29 = arith.constant 0 : index
      %c0_30 = arith.constant 0 : index
      %59 = vector.load %arg7[%c0_29, %c0_30] : memref<128x128xbf16, #tpu.memory_space<vmem>>, vector<128x128xbf16>
      %cst_31 = arith.constant dense<0.000000e+00> : vector<8x128xf32>
      %60 = tpu.matmul %58, %59, %cst_31 {dimension_numbers = #tpu.dot_dimension_numbers<[1], [0], [0], [1], [0, 0, 1, 1], [], []>} : vector<8x128xbf16>, vector<128x128xbf16>, vector<8x128xf32> -> vector<8x128xf32>
      %c0_32 = arith.constant 0 : index
      %c0_33 = arith.constant 0 : index
      %61 = vector.load %arg8[%c0_32, %c0_33] : memref<1x128xf32, #tpu.memory_space<vmem>>, vector<1x128xf32>
      %62 = vector.broadcast %61 : vector<1x128xf32> to vector<8x128xf32>
      %63 = arith.addf %60, %62 : vector<8x128xf32>
      %64 = arith.truncf %63 : vector<8x128xf32> to vector<8x128xbf16>
      %c0_34 = arith.constant 0 : index
      %c0_35 = arith.constant 0 : index
      %65 = vector.load %arg9[%c0_34, %c0_35] : memref<128x128xbf16, #tpu.memory_space<vmem>>, vector<128x128xbf16>
      %cst_36 = arith.constant dense<0.000000e+00> : vector<8x128xf32>
      %66 = tpu.matmul %64, %65, %cst_36 {dimension_numbers = #tpu.dot_dimension_numbers<[1], [0], [0], [1], [0, 0, 1, 1], [], []>} : vector<8x128xbf16>, vector<128x128xbf16>, vector<8x128xf32> -> vector<8x128xf32>
      %c0_37 = arith.constant 0 : index
      %c0_38 = arith.constant 0 : index
      %67 = vector.load %arg10[%c0_37, %c0_38] : memref<1x128xf32, #tpu.memory_space<vmem>>, vector<1x128xf32>
      %68 = vector.broadcast %67 : vector<1x128xf32> to vector<8x128xf32>
      %69 = arith.addf %66, %68 : vector<8x128xf32>
      %c0_39 = arith.constant 0 : index
      %c0_40 = arith.constant 0 : index
      %70 = vector.load %arg11[%c0_39, %c0_40] : memref<8x128xf32, #tpu.memory_space<vmem>>, vector<8x128xf32>
      tpu.vector_store %arg11[%c0_39, %c0_40], %69 {strides = array<i32>} : memref<8x128xf32, #tpu.memory_space<vmem>>, vector<8x128xf32>,
    } else {
    }
    return
  }
  func.func @transform_0(%arg0: i32, %arg1: i32) -> (i32, i32, i32) {
    %c0_i32 = arith.constant 0 : i32
    %c0_i32_0 = arith.constant 0 : i32
    return %arg0, %arg1, %c0_i32 : i32, i32, i32
  }
  func.func @transform_1(%arg0: i32, %arg1: i32) -> (i32, i32) {
    %c0_i32 = arith.constant 0 : i32
    %c0_i32_0 = arith.constant 0 : i32
    %c0_i32_1 = arith.constant 0 : i32
    return %c0_i32, %c0_i32_0 : i32, i32
  }
  func.func @transform_2(%arg0: i32, %arg1: i32) -> (i32, i32) {
    %c0_i32 = arith.constant 0 : i32
    %c0_i32_0 = arith.constant 0 : i32
    %c0_i32_1 = arith.constant 0 : i32
    return %c0_i32, %c0_i32_0 : i32, i32
  }
  func.func @transform_3(%arg0: i32, %arg1: i32) -> (i32, i32) {
    %c0_i32 = arith.constant 0 : i32
    %c0_i32_0 = arith.constant 0 : i32
    %c0_i32_1 = arith.constant 0 : i32
    return %c0_i32, %c0_i32_0 : i32, i32
  }
  func.func @transform_4(%arg0: i32, %arg1: i32) -> (i32, i32) {
    %c0_i32 = arith.constant 0 : i32
    %c0_i32_0 = arith.constant 0 : i32
    %c0_i32_1 = arith.constant 0 : i32
    return %c0_i32, %c0_i32_0 : i32, i32
  }
  func.func @transform_5(%arg0: i32, %arg1: i32) -> (i32, i32) {
    %c0_i32 = arith.constant 0 : i32
    %c0_i32_0 = arith.constant 0 : i32
    %c0_i32_1 = arith.constant 0 : i32
    return %c0_i32, %c0_i32_0 : i32, i32
  }
  func.func @transform_6(%arg0: i32, %arg1: i32) -> (i32, i32) {
    %c0_i32 = arith.constant 0 : i32
    %c0_i32_0 = arith.constant 0 : i32
    %c0_i32_1 = arith.constant 0 : i32
    return %c0_i32, %c0_i32_0 : i32, i32
  }
  func.func @transform_7(%arg0: i32, %arg1: i32) -> (i32, i32) {
    %c0_i32 = arith.constant 0 : i32
    %c0_i32_0 = arith.constant 0 : i32
    %c0_i32_1 = arith.constant 0 : i32
    return %c0_i32, %c0_i32_0 : i32, i32
  }
  func.func @transform_8(%arg0: i32, %arg1: i32) -> (i32, i32) {
    %c0_i32 = arith.constant 0 : i32
    %c0_i32_0 = arith.constant 0 : i32
    %c0_i32_1 = arith.constant 0 : i32
    return %c0_i32, %c0_i32_0 : i32, i32
  }
  func.func @transform_9(%arg0: i32, %arg1: i32) -> (i32, i32) {
    %c0_i32 = arith.constant 0 : i32
    %c0_i32_0 = arith.constant 0 : i32
    return %arg0, %c0_i32 : i32, i32
  }
}

</mosaic_0001>

<llo_original>
// kernel: clip_classifier_forward.1
$region0: #{clip_classifier_forward.1}
  #allocation0 [shape = 'u32[]', space=smem, size = 0x4, offset = 0x4, fixed_abs, tag = 'smem constant byte address 0x4 - core index']
  #allocation1 [shape = 'u32[144,128]{1,0:T(1,128)}', space=vmem, size = 0x12000, scoped, tag = 'internal scratch']
  #allocation2 [shape = 'f32[8,128]{1,0:T(8,128)}', space=vmem, size = 0x1000, scoped, tag = 'scratch operand']
  %s0 = inlined_call_operand.vmem [shape: bf16[8,16,64], index: 0, kind: input, shape index: {}]
  %s1 = inlined_call_operand.vmem [shape: bf16[64,128], index: 1, kind: input, shape index: {}]
  %s2 = inlined_call_operand.vmem [shape: f32[1,128], index: 2, kind: input, shape index: {}]
  %s3 = inlined_call_operand.vmem [shape: f32[1,128], index: 3, kind: input, shape index: {}]
  %s4 = inlined_call_operand.vmem [shape: f32[1,128], index: 4, kind: input, shape index: {}]
  %s5 = inlined_call_operand.vmem [shape: bf16[128,128], index: 5, kind: input, shape index: {}]
  %s6 = inlined_call_operand.vmem [shape: f32[1,128], index: 6, kind: input, shape index: {}]
  %s7 = inlined_call_operand.vmem [shape: bf16[128,128], index: 7, kind: input, shape index: {}]
  %s8 = inlined_call_operand.vmem [shape: f32[1,128], index: 8, kind: input, shape index: {}]
  %s9 = inlined_call_operand.vmem [shape: f32[8,128], index: 9, kind: output, shape index: {}]
  %s10 = sld [smem:[#allocation0]]
  $region54: #{clip_classifier_forward.1} parent=0
    _
  %s12 = ssub.s32 1, %s10
  %s13 = scalar_select 0, %s12, %s10
  // Predicated region
  $region2: #{clip_classifier_forward.1} parent=0 // pred_check
    _
  $region3: #{clip_classifier_forward.1} parent=0 // pred_check_branch
    %15 = sbr.rel (0) target = $region5
  $region4: #{clip_classifier_forward.1} parent=0 // pred_region
    _
  $region5: #{clip_classifier_forward.1} parent=0 // pred_fallthru
    _
  // Predicated region
  $region6: #{clip_classifier_forward.1} parent=0 // pred_check
    _
  $region7: #{clip_classifier_forward.1} parent=0 // pred_check_branch
    %17 = sbr.rel (0) target = $region9
  $region8: #{clip_classifier_forward.1} parent=0 // pred_region
    _
  $region9: #{clip_classifier_forward.1} parent=0 // pred_fallthru
    _
  // Predicated region
  $region10: #{clip_classifier_forward.1} parent=0 // pred_check
    _
  $region11: #{clip_classifier_forward.1} parent=0 // pred_check_branch
    %19 = sbr.rel (0) target = $region13
  $region12: #{clip_classifier_forward.1} parent=0 // pred_region
    _
  $region13: #{clip_classifier_forward.1} parent=0 // pred_fallthru
    _
  // Predicated region
  $region14: #{clip_classifier_forward.1} parent=0 // pred_check
    _
  $region15: #{clip_classifier_forward.1} parent=0 // pred_check_branch
    %21 = sbr.rel (0) target = $region17
  $region16: #{clip_classifier_forward.1} parent=0 // pred_region
    _
  $region17: #{clip_classifier_forward.1} parent=0 // pred_fallthru
    _
  // Predicated region
  $region18: #{clip_classifier_forward.1} parent=0 // pred_check
    _
  $region19: #{clip_classifier_forward.1} parent=0 // pred_check_branch
    %23 = sbr.rel (0) target = $region21
  $region20: #{clip_classifier_forward.1} parent=0 // pred_region
    _
  $region21: #{clip_classifier_forward.1} parent=0 // pred_fallthru
    _
  // Predicated region
  $region22: #{clip_classifier_forward.1} parent=0 // pred_check
    _
  $region23: #{clip_classifier_forward.1} parent=0 // pred_check_branch
    %25 = sbr.rel (0) target = $region25
  $region24: #{clip_classifier_forward.1} parent=0 // pred_region
    _
  $region25: #{clip_classifier_forward.1} parent=0 // pred_fallthru
    _
  // Predicated region
  $region26: #{clip_classifier_forward.1} parent=0 // pred_check
    _
  $region27: #{clip_classifier_forward.1} parent=0 // pred_check_branch
    %27 = sbr.rel (0) target = $region29
  $region28: #{clip_classifier_forward.1} parent=0 // pred_region
    _
  $region29: #{clip_classifier_forward.1} parent=0 // pred_fallthru
    _
  // Predicated region
  $region30: #{clip_classifier_forward.1} parent=0 // pred_check
    _
  $region31: #{clip_classifier_forward.1} parent=0 // pred_check_branch
    %29 = sbr.rel (0) target = $region33
  $region32: #{clip_classifier_forward.1} parent=0 // pred_region
    _
  $region33: #{clip_classifier_forward.1} parent=0 // pred_fallthru
    _
  // Predicated region
  $region34: #{clip_classifier_forward.1} parent=0 // pred_check
    _
  $region35: #{clip_classifier_forward.1} parent=0 // pred_check_branch
    %31 = sbr.rel (0) target = $region37
  $region36: #{clip_classifier_forward.1} parent=0 // pred_region
    _
  $region37: #{clip_classifier_forward.1} parent=0 // pred_fallthru
    _
  %p33 = scmp.eq.s32.totalorder 0, 0
  // Predicated region
  $region38: #{clip_classifier_forward.1} parent=0 // pred_check
    %p34 = pneg %p33
  $region39: #{clip_classifier_forward.1} parent=0 // pred_check_branch
    %36 = sbr.rel (%p34) target = $region41
  $region40: #{clip_classifier_forward.1} parent=0 // pred_region
    %37 = vst [vmem:[#allocation2] sm:$0xff] 0.0
  $region41: #{clip_classifier_forward.1} parent=0 // pred_fallthru
    _
  %v38 = vld [vmem:[%s0] sm:$0xf]
  %v39 = vld [vmem:[%s0 + $0x4] sm:$0xf]
  %v40 = vld [vmem:[%s0 + $0x8] sm:$0xf]
  %v41 = vld [vmem:[%s0 + $0xc] sm:$0xf]
  %v42 = vld [vmem:[%s0 + $0x10] sm:$0xf]
  %v43 = vld [vmem:[%s0 + $0x14] sm:$0xf]
  %v44 = vld [vmem:[%s0 + $0x18] sm:$0xf]
  %v45 = vld [vmem:[%s0 + $0x1c] sm:$0xf]
  %v46 = vld [vmem:[%s0 + $0x20] sm:$0xf]
  %v47 = vld [vmem:[%s0 + $0x24] sm:$0xf]
  %v48 = vld [vmem:[%s0 + $0x28] sm:$0xf]
  %v49 = vld [vmem:[%s0 + $0x2c] sm:$0xf]
  %v50 = vld [vmem:[%s0 + $0x30] sm:$0xf]
  %v51 = vld [vmem:[%s0 + $0x34] sm:$0xf]
  %v52 = vld [vmem:[%s0 + $0x38] sm:$0xf]
  %v53 = vld [vmem:[%s0 + $0x3c] sm:$0xf]
  %v54 = vld [vmem:[%s1] sm:$0xf]
  %v55 = vld [vmem:[%s1 + $0x4] sm:$0xf]
  %v56 = vld [vmem:[%s1 + $0x8] sm:$0xf]
  %v57 = vld [vmem:[%s1 + $0xc] sm:$0xf]
  %v58 = vld [vmem:[%s1 + $0x10] sm:$0xf]
  %v59 = vld [vmem:[%s1 + $0x14] sm:$0xf]
  %v60 = vld [vmem:[%s1 + $0x18] sm:$0xf]
  %v61 = vld [vmem:[%s1 + $0x1c] sm:$0xf]
  %v62 = vld [vmem:[%s2] sm:$0x1]
  %v64 = vlaneseq
  %v65 = vshrl.u32 %v64, 7
  %v66 = vsub.s32 0, %v65
  %v67 = vrot.slane %v62, %v66
  %v85 = vunpack.c.l.b16 %v38
  %v86 = vunpack.c.l.b16 %v39
  %v87 = vunpack.c.l.b16 %v40
  %v88 = vunpack.c.l.b16 %v41
  %v89 = vunpack.c.l.b16 %v42
  %v90 = vunpack.c.l.b16 %v43
  %v91 = vunpack.c.l.b16 %v44
  %v92 = vunpack.c.l.b16 %v45
  %v93 = vunpack.c.l.b16 %v46
  %v94 = vunpack.c.l.b16 %v47
  %v95 = vunpack.c.l.b16 %v48
  %v96 = vunpack.c.l.b16 %v49
  %v97 = vunpack.c.l.b16 %v50
  %v98 = vunpack.c.l.b16 %v51
  %v99 = vunpack.c.l.b16 %v52
  %v100 = vunpack.c.l.b16 %v53
  %v101 = vpack.c.b16 %v86, %v85
  %v102 = vpack.c.b16 %v88, %v87
  %v103 = vpack.c.b16 %v90, %v89
  %v104 = vpack.c.b16 %v92, %v91
  %v105 = vpack.c.b16 %v94, %v93
  %v106 = vpack.c.b16 %v96, %v95
  %v107 = vpack.c.b16 %v98, %v97
  %v108 = vpack.c.b16 %v100, %v99
  %v117 = vunpack.c.l.b16 %v54
  %v118 = vunpack.c.l.b16 %v55
  %v119 = vunpack.c.l.b16 %v56
  %v120 = vunpack.c.l.b16 %v57
  %v121 = vunpack.c.l.b16 %v58
  %v122 = vunpack.c.l.b16 %v59
  %v123 = vunpack.c.l.b16 %v60
  %v124 = vunpack.c.l.b16 %v61
  %v125 = vpack.c.b16 %v118, %v117
  %v126 = vpack.c.b16 %v120, %v119
  %v127 = vpack.c.b16 %v122, %v121
  %v128 = vpack.c.b16 %v124, %v123
  %vm133 = vcmask 523264
  %v135 = vsel %vm133, %v101, 0
  %v138 = vsel %vm133, %v102, 0
  %v141 = vsel %vm133, %v103, 0
  %v144 = vsel %vm133, %v104, 0
  %v147 = vsel %vm133, %v105, 0
  %v150 = vsel %vm133, %v106, 0
  %v153 = vsel %vm133, %v107, 0
  %v156 = vsel %vm133, %v108, 0
  %158 = vmatprep.subr.bf16.mxu0 0
  %159 = vmatpush1.bf16.msra.mxu0 %v125
  %160 = vmatprep.subr.bf16.mxu0 0
  %161 = vmatpush1.bf16.msra.mxu0 %v126
  %162 = vmatprep.subr.bf16.mxu0 0
  %163 = vmatpush1.bf16.msra.mxu0 %v127
  %164 = vmatprep.subr.bf16.mxu0 0
  %165 = vmatpush1.bf16.msra.mxu0 %v128
  %166 = vmatprep.subr.bf16.mxu0 0
  %167 = vmatpush1.bf16.msra.mxu0 0
  %168 = vmatprep.subr.bf16.mxu0 0
  %169 = vmatpush1.bf16.msra.mxu0 0
  %170 = vmatprep.subr.bf16.mxu0 0
  %171 = vmatpush1.bf16.msra.mxu0 0
  %172 = vmatprep.subr.bf16.mxu0 0
  %173 = vmatpush1.bf16.msra.mxu0 0
  %174 = vmatprep.subr.bf16.mxu0 0
  %175 = vmatpush1.bf16.msra.mxu0 0
  %176 = vmatprep.subr.bf16.mxu0 0
  %177 = vmatpush1.bf16.msra.mxu0 0
  %178 = vmatprep.subr.bf16.mxu0 0
  %179 = vmatpush1.bf16.msra.mxu0 0
  %180 = vmatprep.subr.bf16.mxu0 0
  %181 = vmatpush1.bf16.msra.mxu0 0
  %182 = vmatprep.subr.bf16.mxu0 0
  %183 = vmatpush1.bf16.msra.mxu0 0
  %184 = vmatprep.subr.bf16.mxu0 0
  %185 = vmatpush1.bf16.msra.mxu0 0
  %186 = vmatprep.subr.bf16.mxu0 0
  %187 = vmatpush1.bf16.msra.mxu0 0
  %188 = vmatprep.subr.bf16.mxu0 0
  %189 = vmatpush1.bf16.msra.mxu0 0
  %190 = vmatprep.mubr.bf16.mxu0 0
  %191 = vmatmul.mubr.bf16.gmra.mrb[0].mxu0 %v135
  %v192 = vpop.f32.mrb[0].mxu0
  %v193 = vadd.f32 %v67, %v192
  %v194 = vpop.f32.mrb[0].mxu0
  %v195 = vpop.f32.mrb[0].mxu0
  %v196 = vadd.f32 %v67, %v195
  %v197 = vpop.f32.mrb[0].mxu0
  %198 = vmatprep.mubr.bf16.mxu0 0
  %199 = vmatmul.mubr.bf16.gmra.mrb[0].mxu0 %v138
  %v200 = vpop.f32.mrb[0].mxu0
  %v201 = vadd.f32 %v67, %v200
  %v202 = vpop.f32.mrb[0].mxu0
  %v203 = vpop.f32.mrb[0].mxu0
  %v204 = vadd.f32 %v67, %v203
  %v205 = vpop.f32.mrb[0].mxu0
  %206 = vmatprep.mubr.bf16.mxu0 0
  %207 = vmatmul.mubr.bf16.gmra.mrb[0].mxu0 %v141
  %v208 = vpop.f32.mrb[0].mxu0
  %v209 = vadd.f32 %v67, %v208
  %v210 = vpop.f32.mrb[0].mxu0
  %v211 = vpop.f32.mrb[0].mxu0
  %v212 = vadd.f32 %v67, %v211
  %v213 = vpop.f32.mrb[0].mxu0
  %214 = vmatprep.mubr.bf16.mxu0 0
  %215 = vmatmul.mubr.bf16.gmra.mrb[0].mxu0 %v144
  %v216 = vpop.f32.mrb[0].mxu0
  %v217 = vadd.f32 %v67, %v216
  %v218 = vpop.f32.mrb[0].mxu0
  %v219 = vpop.f32.mrb[0].mxu0
  %v220 = vadd.f32 %v67, %v219
  %v221 = vpop.f32.mrb[0].mxu0
  %222 = vmatprep.mubr.bf16.mxu0 0
  %223 = vmatmul.mubr.bf16.gmra.mrb[0].mxu0 %v147
  %v224 = vpop.f32.mrb[0].mxu0
  %v225 = vadd.f32 %v67, %v224
  %v226 = vpop.f32.mrb[0].mxu0
  %v227 = vpop.f32.mrb[0].mxu0
  %v228 = vadd.f32 %v67, %v227
  %v229 = vpop.f32.mrb[0].mxu0
  %230 = vmatprep.mubr.bf16.mxu0 0
  %231 = vmatmul.mubr.bf16.gmra.mrb[0].mxu0 %v150
  %v232 = vpop.f32.mrb[0].mxu0
  %v233 = vadd.f32 %v67, %v232
  %v234 = vpop.f32.mrb[0].mxu0
  %v235 = vpop.f32.mrb[0].mxu0
  %v236 = vadd.f32 %v67, %v235
  %v237 = vpop.f32.mrb[0].mxu0
  %238 = vmatprep.mubr.bf16.mxu0 0
  %239 = vmatmul.mubr.bf16.gmra.mrb[0].mxu0 %v153
  %v240 = vpop.f32.mrb[0].mxu0
  %v241 = vadd.f32 %v67, %v240
  %v242 = vpop.f32.mrb[0].mxu0
  %v243 = vpop.f32.mrb[0].mxu0
  %v244 = vadd.f32 %v67, %v243
  %v245 = vpop.f32.mrb[0].mxu0
  %246 = vmatprep.mubr.bf16.mxu0 0
  %247 = vmatmul.mubr.bf16.gmra.mrb[0].mxu0 %v156
  %v248 = vpop.f32.mrb[0].mxu0
  %v249 = vadd.f32 %v67, %v248
  %v250 = vpop.f32.mrb[0].mxu0
  %v251 = vpop.f32.mrb[0].mxu0
  %v252 = vadd.f32 %v67, %v251
  %v253 = vpop.f32.mrb[0].mxu0
  %254 = vdwg.mxu0
  %v255 = vmul.f32 %v193, 1.702
  %v256 = vmul.f32 %v196, 1.702
  %v257 = vmul.f32 %v201, 1.702
  %v258 = vmul.f32 %v204, 1.702
  %v259 = vmul.f32 %v209, 1.702
  %v260 = vmul.f32 %v212, 1.702
  %v261 = vmul.f32 %v217, 1.702
  %v262 = vmul.f32 %v220, 1.702
  %v263 = vmul.f32 %v225, 1.702
  %v264 = vmul.f32 %v228, 1.702
  %v265 = vmul.f32 %v233, 1.702
  %v266 = vmul.f32 %v236, 1.702
  %v267 = vmul.f32 %v241, 1.702
  %v268 = vmul.f32 %v244, 1.702
  %v269 = vmul.f32 %v249, 1.702
  %v270 = vmul.f32 %v252, 1.702
  %v271 = vxor.u32 %v255, 2147483648
  %v272 = vxor.u32 %v256, 2147483648
  %v273 = vxor.u32 %v257, 2147483648
  %v274 = vxor.u32 %v258, 2147483648
  %v275 = vxor.u32 %v259, 2147483648
  %v276 = vxor.u32 %v260, 2147483648
  %v277 = vxor.u32 %v261, 2147483648
  %v278 = vxor.u32 %v262, 2147483648
  %v279 = vxor.u32 %v263, 2147483648
  %v280 = vxor.u32 %v264, 2147483648
  %v281 = vxor.u32 %v265, 2147483648
  %v282 = vxor.u32 %v266, 2147483648
  %v283 = vxor.u32 %v267, 2147483648
  %v284 = vxor.u32 %v268, 2147483648
  %v285 = vxor.u32 %v269, 2147483648
  %v286 = vxor.u32 %v270, 2147483648
  %v287 = vmul.f32 %v271, 1.442695
  %v288 = vpow.pop %v287
  %v289 = vmul.f32 %v272, 1.442695
  %v290 = vpow.pop %v289
  %v291 = vmul.f32 %v273, 1.442695
  %v292 = vpow.pop %v291
  %v293 = vmul.f32 %v274, 1.442695
  %v294 = vpow.pop %v293
  %v295 = vmul.f32 %v275, 1.442695
  %v296 = vpow.pop %v295
  %v297 = vmul.f32 %v276, 1.442695
  %v298 = vpow.pop %v297
  %v299 = vmul.f32 %v277, 1.442695
  %v300 = vpow.pop %v299
  %v301 = vmul.f32 %v278, 1.442695
  %v302 = vpow.pop %v301
  %v303 = vmul.f32 %v279, 1.442695
  %v304 = vpow.pop %v303
  %v305 = vmul.f32 %v280, 1.442695
  %v306 = vpow.pop %v305
  %v307 = vmul.f32 %v281, 1.442695
  %v308 = vpow.pop %v307
  %v309 = vmul.f32 %v282, 1.442695
  %v310 = vpow.pop %v309
  %v311 = vmul.f32 %v283, 1.442695
  %v312 = vpow.pop %v311
  %v313 = vmul.f32 %v284, 1.442695
  %v314 = vpow.pop %v313
  %v315 = vmul.f32 %v285, 1.442695
  %v316 = vpow.pop %v315
  %v317 = vmul.f32 %v286, 1.442695
  %v318 = vpow.pop %v317
  %v319 = vadd.f32 %v288, 1.0
  %v320 = vadd.f32 %v290, 1.0
  %v321 = vadd.f32 %v292, 1.0
  %v322 = vadd.f32 %v294, 1.0
  %v323 = vadd.f32 %v296, 1.0
  %v324 = vadd.f32 %v298, 1.0
  %v325 = vadd.f32 %v300, 1.0
  %v326 = vadd.f32 %v302, 1.0
  %v327 = vadd.f32 %v304, 1.0
  %v328 = vadd.f32 %v306, 1.0
  %v329 = vadd.f32 %v308, 1.0
  %v330 = vadd.f32 %v310, 1.0
  %v331 = vadd.f32 %v312, 1.0
  %v332 = vadd.f32 %v314, 1.0
  %v333 = vadd.f32 %v316, 1.0
  %v334 = vadd.f32 %v318, 1.0
  %v335 = vrcp.pop %v319
  %v336 = vmul.f32 1.0, %v335
  %v337 = vrcp.pop %v320
  %v338 = vmul.f32 1.0, %v337
  %v339 = vrcp.pop %v321
  %v340 = vmul.f32 1.0, %v339
  %v341 = vrcp.pop %v322
  %v342 = vmul.f32 1.0, %v341
  %v343 = vrcp.pop %v323
  %v344 = vmul.f32 1.0, %v343
  %v345 = vrcp.pop %v324
  %v346 = vmul.f32 1.0, %v345
  %v347 = vrcp.pop %v325
  %v348 = vmul.f32 1.0, %v347
  %v349 = vrcp.pop %v326
  %v350 = vmul.f32 1.0, %v349
  %v351 = vrcp.pop %v327
  %v352 = vmul.f32 1.0, %v351
  %v353 = vrcp.pop %v328
  %v354 = vmul.f32 1.0, %v353
  %v355 = vrcp.pop %v329
  %v356 = vmul.f32 1.0, %v355
  %v357 = vrcp.pop %v330
  %v358 = vmul.f32 1.0, %v357
  %v359 = vrcp.pop %v331
  %v360 = vmul.f32 1.0, %v359
  %v361 = vrcp.pop %v332
  %v362 = vmul.f32 1.0, %v361
  %v363 = vrcp.pop %v333
  %v364 = vmul.f32 1.0, %v363
  %v365 = vrcp.pop %v334
  %v366 = vmul.f32 1.0, %v365
  %v367 = vmul.f32 %v193, %v336
  %v368 = vmul.f32 %v196, %v338
  %v369 = vmul.f32 %v201, %v340
  %v370 = vmul.f32 %v204, %v342
  %v371 = vmul.f32 %v209, %v344
  %v372 = vmul.f32 %v212, %v346
  %v373 = vmul.f32 %v217, %v348
  %v374 = vmul.f32 %v220, %v350
  %v375 = vmul.f32 %v225, %v352
  %v376 = vmul.f32 %v228, %v354
  %v377 = vmul.f32 %v233, %v356
  %v378 = vmul.f32 %v236, %v358
  %v379 = vmul.f32 %v241, %v360
  %v380 = vmul.f32 %v244, %v362
  %v381 = vmul.f32 %v249, %v364
  %v382 = vmul.f32 %v252, %v366
  %v383 = vld [vmem:[#allocation2] sm:$0xff]
  %v384 = vadd.f32 %v367, %v368
  %v385 = vrot.slane %v384, 4
  %v386 = vadd.f32 %v384, %v385
  %v387 = vrot.slane %v386, 2
  %v388 = vadd.f32 %v386, %v387
  %v389 = vrot.slane %v388, 1
  %v390 = vadd.f32 %v388, %v389
  %v391 = vadd.f32 %v369, %v370
  %v392 = vrot.slane %v391, 4
  %v393 = vadd.f32 %v391, %v392
  %v394 = vrot.slane %v393, 2
  %v395 = vadd.f32 %v393, %v394
  %v396 = vrot.slane %v395, 1
  %v397 = vadd.f32 %v395, %v396
  %v398 = vadd.f32 %v371, %v372
  %v399 = vrot.slane %v398, 4
  %v400 = vadd.f32 %v398, %v399
  %v401 = vrot.slane %v400, 2
  %v402 = vadd.f32 %v400, %v401
  %v403 = vrot.slane %v402, 1
  %v404 = vadd.f32 %v402, %v403
  %v405 = vadd.f32 %v373, %v374
  %v406 = vrot.slane %v405, 4
  %v407 = vadd.f32 %v405, %v406
  %v408 = vrot.slane %v407, 2
  %v409 = vadd.f32 %v407, %v408
  %v410 = vrot.slane %v409, 1
  %v411 = vadd.f32 %v409, %v410
  %v412 = vadd.f32 %v375, %v376
  %v413 = vrot.slane %v412, 4
  %v414 = vadd.f32 %v412, %v413
  %v415 = vrot.slane %v414, 2
  %v416 = vadd.f32 %v414, %v415
  %v417 = vrot.slane %v416, 1
  %v418 = vadd.f32 %v416, %v417
  %v419 = vadd.f32 %v377, %v378
  %v420 = vrot.slane %v419, 4
  %v421 = vadd.f32 %v419, %v420
  %v422 = vrot.slane %v421, 2
  %v423 = vadd.f32 %v421, %v422
  %v424 = vrot.slane %v423, 1
  %v425 = vadd.f32 %v423, %v424
  %v426 = vadd.f32 %v379, %v380
  %v427 = vrot.slane %v426, 4
  %v428 = vadd.f32 %v426, %v427
  %v429 = vrot.slane %v428, 2
  %v430 = vadd.f32 %v428, %v429
  %v431 = vrot.slane %v430, 1
  %v432 = vadd.f32 %v430, %v431
  %v433 = vadd.f32 %v381, %v382
  %v434 = vrot.slane %v433, 4
  %v435 = vadd.f32 %v433, %v434
  %v436 = vrot.slane %v435, 2
  %v437 = vadd.f32 %v435, %v436
  %v438 = vrot.slane %v437, 1
  %v439 = vadd.f32 %v437, %v438
  %vm448 = vcmask 1041409
  %v449 = vsel %vm448, %v397, %v390
  %vm450 = vcmask 1042434
  %v451 = vsel %vm450, %v404, %v449
  %vm452 = vcmask 1043459
  %v453 = vsel %vm452, %v411, %v451
  %vm454 = vcmask 1044484
  %v455 = vsel %vm454, %v418, %v453
  %vm456 = vcmask 1045509
  %v457 = vsel %vm456, %v425, %v455
  %vm458 = vcmask 1046534
  %v459 = vsel %vm458, %v432, %v457
  %vm460 = vcmask 1047559
  %v461 = vsel %vm460, %v439, %v459
  %v463 = vadd.f32 %v383, %v461
  %464 = vst [vmem:[#allocation2] sm:$0xff] %v463
  // Predicated region
  $region42: #{clip_classifier_forward.1} parent=0 // pred_check
    %p465 = pneg %p33
  $region43: #{clip_classifier_forward.1} parent=0 // pred_check_branch
    %467 = sbr.rel (%p465) target = $region45
  $region44: #{clip_classifier_forward.1} parent=0 // pred_region
    %v468 = vld [vmem:[#allocation2] sm:$0xff]
    %v469 = vmul.f32 %v468, 0.0625
    %470 = vadd.xlane.f32.xlu0 %v469
    %v471 = vpop.xlane.xlu0 %470
    %v472 = vmul.f32 %v471, 0.03125
    %v473 = vsub.f32 %v469, %v472
    %v474 = vlaneseq
    %v475 = vand.u32 %v474, 127
    %vm476 = vcmp.lt.s32.totalorder %v475, 32
    %v477 = vsel %vm476, 1, 0
    %vm478 = vcmp.eq.s32.totalorder %v477, 1
    %v479 = vsel %vm478, %v473, 0.0
    %v480 = vmul.f32 %v479, %v479
    %481 = vadd.xlane.f32.xlu0 %v480
    %v482 = vpop.xlane.xlu0 %481
    %v483 = vmul.f32 %v482, 0.03125
    %v484 = vadd.f32 %v483, 1e-05
    %v485 = vrsqrt.pop %v484
    %v486 = vmul.f32 %v479, %v485
    %v487 = vld [vmem:[%s3] sm:$0x1]
    %v489 = vlaneseq
    %v490 = vshrl.u32 %v489, 7
    %v491 = vsub.s32 0, %v490
    %v492 = vrot.slane %v487, %v491
    %v494 = vmul.f32 %v486, %v492
    %v495 = vld [vmem:[%s4] sm:$0x1]
    %v497 = vlaneseq
    %v498 = vshrl.u32 %v497, 7
    %v499 = vsub.s32 0, %v498
    %v500 = vrot.slane %v495, %v499
    %v502 = vadd.f32 %v494, %v500
    %v503 = vpack.c.bf16 %v502, %v502
    %v504 = vld [vmem:[%s5] sm:$0xf]
    %v505 = vld [vmem:[%s5 + $0x4] sm:$0xf]
    %v506 = vld [vmem:[%s5 + $0x8] sm:$0xf]
    %v507 = vld [vmem:[%s5 + $0xc] sm:$0xf]
    %v508 = vld [vmem:[%s5 + $0x10] sm:$0xf]
    %v509 = vld [vmem:[%s5 + $0x14] sm:$0xf]
    %v510 = vld [vmem:[%s5 + $0x18] sm:$0xf]
    %v511 = vld [vmem:[%s5 + $0x1c] sm:$0xf]
    %v512 = vld [vmem:[%s5 + $0x20] sm:$0xf]
    %v513 = vld [vmem:[%s5 + $0x24] sm:$0xf]
    %v514 = vld [vmem:[%s5 + $0x28] sm:$0xf]
    %v515 = vld [vmem:[%s5 + $0x2c] sm:$0xf]
    %v516 = vld [vmem:[%s5 + $0x30] sm:$0xf]
    %v517 = vld [vmem:[%s5 + $0x34] sm:$0xf]
    %v518 = vld [vmem:[%s5 + $0x38] sm:$0xf]
    %v519 = vld [vmem:[%s5 + $0x3c] sm:$0xf]
    %v520 = vld [vmem:[%s6] sm:$0x1]
    %v522 = vlaneseq
    %v523 = vshrl.u32 %v522, 7
    %v524 = vsub.s32 0, %v523
    %v525 = vrot.slane %v520, %v524
    %v543 = vunpack.c.l.b16 %v504
    %v544 = vunpack.c.l.b16 %v505
    %v545 = vunpack.c.l.b16 %v506
    %v546 = vunpack.c.l.b16 %v507
    %v547 = vunpack.c.l.b16 %v508
    %v548 = vunpack.c.l.b16 %v509
    %v549 = vunpack.c.l.b16 %v510
    %v550 = vunpack.c.l.b16 %v511
    %v551 = vunpack.c.l.b16 %v512
    %v552 = vunpack.c.l.b16 %v513
    %v553 = vunpack.c.l.b16 %v514
    %v554 = vunpack.c.l.b16 %v515
    %v555 = vunpack.c.l.b16 %v516
    %v556 = vunpack.c.l.b16 %v517
    %v557 = vunpack.c.l.b16 %v518
    %v558 = vunpack.c.l.b16 %v519
    %v559 = vpack.c.b16 %v544, %v543
    %v560 = vpack.c.b16 %v546, %v545
    %v561 = vpack.c.b16 %v548, %v547
    %v562 = vpack.c.b16 %v550, %v549
    %v563 = vpack.c.b16 %v552, %v551
    %v564 = vpack.c.b16 %v554, %v553
    %v565 = vpack.c.b16 %v556, %v555
    %v566 = vpack.c.b16 %v558, %v557
    %575 = vmatprep.subr.bf16.mxu0 0
    %576 = vmatpush1.bf16.msra.mxu0 %v559
    %577 = vmatprep.subr.bf16.mxu0 0
    %578 = vmatpush1.bf16.msra.mxu0 %v560
    %579 = vmatprep.subr.bf16.mxu0 0
    %580 = vmatpush1.bf16.msra.mxu0 %v561
    %581 = vmatprep.subr.bf16.mxu0 0
    %582 = vmatpush1.bf16.msra.mxu0 %v562
    %583 = vmatprep.subr.bf16.mxu0 0
    %584 = vmatpush1.bf16.msra.mxu0 %v563
    %585 = vmatprep.subr.bf16.mxu0 0
    %586 = vmatpush1.bf16.msra.mxu0 %v564
    %587 = vmatprep.subr.bf16.mxu0 0
    %588 = vmatpush1.bf16.msra.mxu0 %v565
    %589 = vmatprep.subr.bf16.mxu0 0
    %590 = vmatpush1.bf16.msra.mxu0 %v566
    %591 = vmatprep.subr.bf16.mxu0 0
    %592 = vmatpush1.bf16.msra.mxu0 0
    %593 = vmatprep.subr.bf16.mxu0 0
    %594 = vmatpush1.bf16.msra.mxu0 0
    %595 = vmatprep.subr.bf16.mxu0 0
    %596 = vmatpush1.bf16.msra.mxu0 0
    %597 = vmatprep.subr.bf16.mxu0 0
    %598 = vmatpush1.bf16.msra.mxu0 0
    %599 = vmatprep.subr.bf16.mxu0 0
    %600 = vmatpush1.bf16.msra.mxu0 0
    %601 = vmatprep.subr.bf16.mxu0 0
    %602 = vmatpush1.bf16.msra.mxu0 0
    %603 = vmatprep.subr.bf16.mxu0 0
    %604 = vmatpush1.bf16.msra.mxu0 0
    %605 = vmatprep.subr.bf16.mxu0 0
    %606 = vmatpush1.bf16.msra.mxu0 0
    %607 = vmatprep.mubr.bf16.mxu0 0
    %608 = vmatmul.mubr.bf16.gmra.mrb[0].mxu0 %v503
    %v609 = vpop.f32.mrb[0].mxu0
    %v610 = vadd.f32 %v525, %v609
    %v611 = vpop.f32.mrb[0].mxu0
    %v612 = vpop.f32.mrb[0].mxu0
    %v613 = vpop.f32.mrb[0].mxu0
    %614 = vdwg.mxu0
    %v615 = vpack.c.bf16 %v610, %v610
    %v616 = vld [vmem:[%s7] sm:$0xf]
    %v617 = vld [vmem:[%s7 + $0x4] sm:$0xf]
    %v618 = vld [vmem:[%s7 + $0x8] sm:$0xf]
    %v619 = vld [vmem:[%s7 + $0xc] sm:$0xf]
    %v620 = vld [vmem:[%s7 + $0x10] sm:$0xf]
    %v621 = vld [vmem:[%s7 + $0x14] sm:$0xf]
    %v622 = vld [vmem:[%s7 + $0x18] sm:$0xf]
    %v623 = vld [vmem:[%s7 + $0x1c] sm:$0xf]
    %v624 = vld [vmem:[%s7 + $0x20] sm:$0xf]
    %v625 = vld [vmem:[%s7 + $0x24] sm:$0xf]
    %v626 = vld [vmem:[%s7 + $0x28] sm:$0xf]
    %v627 = vld [vmem:[%s7 + $0x2c] sm:$0xf]
    %v628 = vld [vmem:[%s7 + $0x30] sm:$0xf]
    %v629 = vld [vmem:[%s7 + $0x34] sm:$0xf]
    %v630 = vld [vmem:[%s7 + $0x38] sm:$0xf]
    %v631 = vld [vmem:[%s7 + $0x3c] sm:$0xf]
    %v632 = vld [vmem:[%s8] sm:$0x1]
    %v634 = vlaneseq
    %v635 = vshrl.u32 %v634, 7
    %v636 = vsub.s32 0, %v635
    %v637 = vrot.slane %v632, %v636
    %v655 = vunpack.c.l.b16 %v616
    %v656 = vunpack.c.l.b16 %v617
    %v657 = vunpack.c.l.b16 %v618
    %v658 = vunpack.c.l.b16 %v619
    %v659 = vunpack.c.l.b16 %v620
    %v660 = vunpack.c.l.b16 %v621
    %v661 = vunpack.c.l.b16 %v622
    %v662 = vunpack.c.l.b16 %v623
    %v663 = vunpack.c.l.b16 %v624
    %v664 = vunpack.c.l.b16 %v625
    %v665 = vunpack.c.l.b16 %v626
    %v666 = vunpack.c.l.b16 %v627
    %v667 = vunpack.c.l.b16 %v628
    %v668 = vunpack.c.l.b16 %v629
    %v669 = vunpack.c.l.b16 %v630
    %v670 = vunpack.c.l.b16 %v631
    %v671 = vpack.c.b16 %v656, %v655
    %v672 = vpack.c.b16 %v658, %v657
    %v673 = vpack.c.b16 %v660, %v659
    %v674 = vpack.c.b16 %v662, %v661
    %v675 = vpack.c.b16 %v664, %v663
    %v676 = vpack.c.b16 %v666, %v665
    %v677 = vpack.c.b16 %v668, %v667
    %v678 = vpack.c.b16 %v670, %v669
    %687 = vmatprep.subr.bf16.mxu0 0
    %688 = vmatpush1.bf16.msra.mxu0 %v671
    %689 = vmatprep.subr.bf16.mxu0 0
    %690 = vmatpush1.bf16.msra.mxu0 %v672
    %691 = vmatprep.subr.bf16.mxu0 0
    %692 = vmatpush1.bf16.msra.mxu0 %v673
    %693 = vmatprep.subr.bf16.mxu0 0
    %694 = vmatpush1.bf16.msra.mxu0 %v674
    %695 = vmatprep.subr.bf16.mxu0 0
    %696 = vmatpush1.bf16.msra.mxu0 %v675
    %697 = vmatprep.subr.bf16.mxu0 0
    %698 = vmatpush1.bf16.msra.mxu0 %v676
    %699 = vmatprep.subr.bf16.mxu0 0
    %700 = vmatpush1.bf16.msra.mxu0 %v677
    %701 = vmatprep.subr.bf16.mxu0 0
    %702 = vmatpush1.bf16.msra.mxu0 %v678
    %703 = vmatprep.subr.bf16.mxu0 0
    %704 = vmatpush1.bf16.msra.mxu0 0
    %705 = vmatprep.subr.bf16.mxu0 0
    %706 = vmatpush1.bf16.msra.mxu0 0
    %707 = vmatprep.subr.bf16.mxu0 0
    %708 = vmatpush1.bf16.msra.mxu0 0
    %709 = vmatprep.subr.bf16.mxu0 0
    %710 = vmatpush1.bf16.msra.mxu0 0
    %711 = vmatprep.subr.bf16.mxu0 0
    %712 = vmatpush1.bf16.msra.mxu0 0
    %713 = vmatprep.subr.bf16.mxu0 0
    %714 = vmatpush1.bf16.msra.mxu0 0
    %715 = vmatprep.subr.bf16.mxu0 0
    %716 = vmatpush1.bf16.msra.mxu0 0
    %717 = vmatprep.subr.bf16.mxu0 0
    %718 = vmatpush1.bf16.msra.mxu0 0
    %719 = vmatprep.mubr.bf16.mxu0 0
    %720 = vmatmul.mubr.bf16.gmra.mrb[0].mxu0 %v615
    %v721 = vpop.f32.mrb[0].mxu0
    %v722 = vadd.f32 %v637, %v721
    %v723 = vpop.f32.mrb[0].mxu0
    %v724 = vpop.f32.mrb[0].mxu0
    %v725 = vpop.f32.mrb[0].mxu0
    %726 = vdwg.mxu0
    %727 = vst [vmem:[%s9] sm:$0xff] %v722
  $region45: #{clip_classifier_forward.1} parent=0 // pred_fallthru
    _
  // Predicated region
  $region46: #{clip_classifier_forward.1} parent=0 // pred_check
    _
  $region47: #{clip_classifier_forward.1} parent=0 // pred_check_branch
    %729 = sbr.rel (0) target = $region49
  $region48: #{clip_classifier_forward.1} parent=0 // pred_region
    _
  $region49: #{clip_classifier_forward.1} parent=0 // pred_fallthru
    _
  // Predicated region
  $region50: #{clip_classifier_forward.1} parent=0 // pred_check
    _
  $region51: #{clip_classifier_forward.1} parent=0 // pred_check_branch
    %731 = sbr.rel (0) target = $region53
  $region52: #{clip_classifier_forward.1} parent=0 // pred_region
    _
  $region53: #{clip_classifier_forward.1} parent=0 // pred_fallthru
    _

</llo_original>
